<compile_context>
chip_gen: v6e
topology: v6e:2x2x1
jax: 0.10.0
libtpu: 0.0.40
codegen_flags: <defaults>
</compile_context>

<pallas_src>
import math

import jax
import jax.numpy as jnp
from jax.experimental import pallas as pl
from jax.experimental.pallas import tpu as pltpu

BN_EPS = 1e-5
HIDDEN = 16
N_CLASSES = 5
PACK_LANES = 128   # lane width of the packed-parameter slab
VEC_ROWS = 8       # rows reserved in the slab for the vector params


def _make_kernel(din_pad, n):
    """Builds the per-graph kernel; din_pad / n are static (trace-time)."""
    inv_n = 1.0 / float(n)
    r_w = din_pad            # row offset of W2 / W_pred block in the slab
    r_v = din_pad + HIDDEN   # row offset of the vector-param block

    def kernel(adj_ref, feat_ref, slab_ref, out_ref):
        adj = adj_ref[0]                                  # (N, N)
        feat = feat_ref[0]                                # (N, din_pad)

        # Static sub-tile slices of the single packed parameter slab.
        w_comb = slab_ref[:din_pad, :HIDDEN]              # (din_pad, 16)
        w2 = slab_ref[r_w:r_w + HIDDEN, :HIDDEN]          # (16, 16)
        w_pred = slab_ref[r_w:r_w + HIDDEN,
                          HIDDEN:HIDDEN + N_CLASSES]      # (16, 5)
        b_comb = slab_ref[r_v + 0:r_v + 1, :HIDDEN]       # (1, 16)
        gamma1 = slab_ref[r_v + 1:r_v + 2, :HIDDEN]
        beta1 = slab_ref[r_v + 2:r_v + 3, :HIDDEN]
        gamma2 = slab_ref[r_v + 3:r_v + 4, :HIDDEN]
        beta2 = slab_ref[r_v + 4:r_v + 5, :HIDDEN]
        b_pred = slab_ref[r_v + 5:r_v + 6, :N_CLASSES]    # (1, 5)

        # Ones row: node-axis reductions go to the otherwise idle MXU.
        ones_row = jnp.ones((1, n), jnp.float32)

        def bn_tanh(x, gamma, beta):
            # Training-mode BatchNorm1d over the node axis (biased variance).
            # Single fused stats matmul: [mean | E[x^2]] in one (1,32) result.
            stats = jnp.dot(ones_row,
                            jnp.concatenate([x, x * x], axis=-1),
                            preferred_element_type=jnp.float32) * inv_n
            mean = stats[:, :HIDDEN]
            var = jnp.maximum(stats[:, HIDDEN:] - mean * mean, 0.0)
            y = (x - mean) * jax.lax.rsqrt(var + BN_EPS)
            return jnp.tanh(y * gamma + beta)

        # --- GCN layer 1 (input nn.Linear folded into W1) ---
        s1 = jnp.dot(feat, w_comb,
                     preferred_element_type=jnp.float32) + b_comb   # (N, 16)
        o1 = bn_tanh(jnp.dot(adj, s1, preferred_element_type=jnp.float32),
                     gamma1, beta1)

        # --- GCN layer 2 ---
        s2 = jnp.dot(o1, w2, preferred_element_type=jnp.float32)
        o2 = bn_tanh(jnp.dot(adj, s2, preferred_element_type=jnp.float32),
                     gamma2, beta2)

        # Graph embedding = sum over nodes (MXU); dropout = identity.
        emb = jnp.dot(ones_row, o2,
                      preferred_element_type=jnp.float32)           # (1, 16)

        # --- nn.Linear(16, 5) prediction head ---
        pred = jnp.dot(emb, w_pred,
                       preferred_element_type=jnp.float32) + b_pred  # (1, 5)

        # Lane-dense output row: pred in lanes 0:5, zeros elsewhere.
        out_ref[0] = jnp.concatenate(
            [pred, jnp.zeros((1, PACK_LANES - N_CLASSES), jnp.float32)],
            axis=-1)

    return kernel


def fold_params(params, input_dim):
    """Weight folding + packing into ONE aligned slab (done once, host side)."""
    din_pad = ((max(input_dim, 1) + 7) // 8) * 8
    rows = din_pad + HIDDEN + VEC_ROWS

    w_comb = params["w_lin"] @ params["w1"]               # (Din, 16)
    b_comb = params["b_lin"] @ params["w1"]               # (1, 16)

    slab = jnp.zeros((rows, PACK_LANES), jnp.float32)
    slab = slab.at[:input_dim, :HIDDEN].set(w_comb)
    r_w = din_pad
    slab = slab.at[r_w:r_w + HIDDEN, :HIDDEN].set(params["w2"])
    slab = slab.at[r_w:r_w + HIDDEN,
                   HIDDEN:HIDDEN + N_CLASSES].set(params["w_pred"])
    r_v = din_pad + HIDDEN
    slab = slab.at[r_v + 0, :HIDDEN].set(b_comb[0])
    slab = slab.at[r_v + 1, :HIDDEN].set(params["gamma1"][0])
    slab = slab.at[r_v + 2, :HIDDEN].set(params["beta1"][0])
    slab = slab.at[r_v + 3, :HIDDEN].set(params["gamma2"][0])
    slab = slab.at[r_v + 4, :HIDDEN].set(params["beta2"][0])
    slab = slab.at[r_v + 5, :N_CLASSES].set(params["b_pred"][0])
    return slab


def gcn_net_forward(adjacency, feature, slab):
    """Batched GcnNet forward.

    adjacency: (B, N, N) or (N, N); feature: (B, N, Din) or (N, Din).
    Returns (B, 5) (or (1, 5) for un-batched inputs).
    """
    squeeze = adjacency.ndim == 2
    if squeeze:
        adjacency = adjacency[None]
        feature = feature[None]

    b, n, _ = adjacency.shape
    rows = slab.shape[0]
    din_pad = rows - HIDDEN - VEC_ROWS
    din = feature.shape[-1]
    if din < din_pad:  # zero-pad feature cols; matching slab rows are zero too
        feature = jnp.pad(feature, ((0, 0), (0, 0), (0, din_pad - din)))

    out = pl.pallas_call(
        _make_kernel(din_pad, n),
        out_shape=jax.ShapeDtypeStruct((b, 1, PACK_LANES), jnp.float32),
        grid=(b,),
        in_specs=[
            pl.BlockSpec((1, n, n), lambda g: (g, 0, 0)),
            pl.BlockSpec((1, n, din_pad), lambda g: (g, 0, 0)),
            pl.BlockSpec((rows, PACK_LANES), lambda g: (0, 0)),  # resident
        ],
        out_specs=pl.BlockSpec((1, 1, PACK_LANES), lambda g: (g, 0, 0)),
        compiler_params=pltpu.CompilerParams(
            dimension_semantics=("parallel",)),
    )(adjacency, feature, slab)

    return out[:, 0, :N_CLASSES]


def init_params(key, input_dim):
    """Deterministic parameter init mirroring the PyTorch module's shapes."""
    ks = jax.random.split(key, 6)

    # nn.Linear(input_dim, 16): PyTorch default uniform(-1/sqrt(fan_in), ...)
    lin_bound = 1.0 / math.sqrt(input_dim)
    w_lin = jax.random.uniform(ks[0], (input_dim, HIDDEN), jnp.float32,
                               -lin_bound, lin_bound)
    b_lin = jax.random.uniform(ks[1], (1, HIDDEN), jnp.float32,
                               -lin_bound, lin_bound)

    # GraphConvolution weights: uniform(-1/sqrt(out_features), ...)
    gcn_bound = 1.0 / math.sqrt(HIDDEN)
    w1 = jax.random.uniform(ks[2], (HIDDEN, HIDDEN), jnp.float32,
                            -gcn_bound, gcn_bound)
    w2 = jax.random.uniform(ks[3], (HIDDEN, HIDDEN), jnp.float32,
                            -gcn_bound, gcn_bound)

    # BatchNorm1d affine params (default init: gamma=1, beta=0)
    gamma1 = jnp.ones((1, HIDDEN), jnp.float32)
    beta1 = jnp.zeros((1, HIDDEN), jnp.float32)
    gamma2 = jnp.ones((1, HIDDEN), jnp.float32)
    beta2 = jnp.zeros((1, HIDDEN), jnp.float32)

    # nn.Linear(16, 5)
    pred_bound = 1.0 / math.sqrt(HIDDEN)
    w_pred = jax.random.uniform(ks[4], (HIDDEN, N_CLASSES), jnp.float32,
                                -pred_bound, pred_bound)
    b_pred = jax.random.uniform(ks[5], (1, N_CLASSES), jnp.float32,
                                -pred_bound, pred_bound)

    return dict(w_lin=w_lin, b_lin=b_lin, w1=w1, gamma1=gamma1, beta1=beta1,
                w2=w2, gamma2=gamma2, beta2=beta2,
                w_pred=w_pred, b_pred=b_pred)


def reference_forward(adjacency, feature, p):
    """Pure-JAX single-graph reference (un-folded params) for a sanity check."""
    h = feature @ p["w_lin"] + p["b_lin"]

    def gcn(x, w, gamma, beta):
        out = adjacency @ (x @ w)
        mean = out.mean(0, keepdims=True)
        var = ((out - mean) ** 2).mean(0, keepdims=True)
        out = (out - mean) / jnp.sqrt(var + BN_EPS) * gamma + beta
        return jnp.tanh(out)

    o1 = gcn(h, p["w1"], p["gamma1"], p["beta1"])
    o2 = gcn(o1, p["w2"], p["gamma2"], p["beta2"])
    emb = o2.sum(0, keepdims=True)
    return emb @ p["w_pred"] + p["b_pred"]


if __name__ == "__main__":
    key = jax.random.PRNGKey(0)
    k_adj, k_feat, k_param = jax.random.split(key, 3)

    num_graphs = 2
    num_nodes = 16
    input_dim = 8

    # Symmetric row-normalized adjacency-like matrices (dense spmm stand-in).
    raw = jax.random.uniform(k_adj, (num_graphs, num_nodes, num_nodes),
                             jnp.float32)
    adj = (raw + jnp.swapaxes(raw, -1, -2)) * 0.5 \
        + jnp.eye(num_nodes, dtype=jnp.float32)[None]
    adj = adj / jnp.sum(adj, axis=-1, keepdims=True)

    feature = jax.random.normal(k_feat, (num_graphs, num_nodes, input_dim),
                                jnp.float32)
    params = init_params(k_param, input_dim)
    slab = jax.block_until_ready(fold_params(params, input_dim))

    out = gcn_net_forward(adj, feature, slab)
    out = jax.block_until_ready(out)

    ref = jnp.stack([reference_forward(adj[g], feature[g], params)[0]
                     for g in range(num_graphs)])
    assert out.shape == (num_graphs, N_CLASSES), out.shape
    assert jnp.allclose(out, ref, atol=1e-4, rtol=1e-4), (out, ref)

    print("KERNEL_OK")
</pallas_src>

<mosaic_0001>
module attributes {stable_mosaic.version = 11 : i64} {
  func.func @kernel(%arg0: i32, %arg1: memref<1x16x16xf32, #tpu.memory_space<vmem>>, %arg2: memref<1x16x8xf32, #tpu.memory_space<vmem>>, %arg3: memref<32x128xf32, #tpu.memory_space<vmem>>, %arg4: memref<1x1x128xf32, #tpu.memory_space<vmem>>) attributes {dimension_semantics = [#tpu.dimension_semantics<parallel>], iteration_bounds = array<i64: 2>, scalar_prefetch = 0 : i64, scratch_operands = 0 : i64, tpu.core_type = #tpu.core_type<tc>, window_params = [{transform_indices = @transform_0, window_bounds = array<i64: 1, 16, 16>}, {transform_indices = @transform_1, window_bounds = array<i64: 1, 16, 8>}, {pipeline_mode = #tpu.pipeline_mode<synchronous>, transform_indices = @transform_2, window_bounds = array<i64: 32, 128>}, {transform_indices = @transform_3, window_bounds = array<i64: 1, 1, 128>}]} {
    %c0 = arith.constant 0 : index
    %c0_0 = arith.constant 0 : index
    %c0_1 = arith.constant 0 : index
    %0 = vector.load %arg1[%c0, %c0_0, %c0_1] : memref<1x16x16xf32, #tpu.memory_space<vmem>>, vector<1x16x16xf32>
    %1 = vector.shape_cast %0 : vector<1x16x16xf32> to vector<16x16xf32>
    %c0_2 = arith.constant 0 : index
    %c0_3 = arith.constant 0 : index
    %c0_4 = arith.constant 0 : index
    %2 = vector.load %arg2[%c0_2, %c0_3, %c0_4] : memref<1x16x8xf32, #tpu.memory_space<vmem>>, vector<1x16x8xf32>
    %3 = vector.shape_cast %2 : vector<1x16x8xf32> to vector<16x8xf32>
    %c0_5 = arith.constant 0 : index
    %c0_6 = arith.constant 0 : index
    %4 = vector.load %arg3[%c0_5, %c0_6] : memref<32x128xf32, #tpu.memory_space<vmem>>, vector<8x16xf32>
    %c8 = arith.constant 8 : index
    %c0_7 = arith.constant 0 : index
    %5 = vector.load %arg3[%c8, %c0_7] : memref<32x128xf32, #tpu.memory_space<vmem>>, vector<16x16xf32>
    %c8_8 = arith.constant 8 : index
    %c16 = arith.constant 16 : index
    %6 = vector.load %arg3[%c8_8, %c16] : memref<32x128xf32, #tpu.memory_space<vmem>>, vector<16x5xf32>
    %c24 = arith.constant 24 : index
    %c0_9 = arith.constant 0 : index
    %7 = vector.load %arg3[%c24, %c0_9] : memref<32x128xf32, #tpu.memory_space<vmem>>, vector<1x16xf32>
    %c25 = arith.constant 25 : index
    %c0_10 = arith.constant 0 : index
    %8 = vector.load %arg3[%c25, %c0_10] : memref<32x128xf32, #tpu.memory_space<vmem>>, vector<1x16xf32>
    %c26 = arith.constant 26 : index
    %c0_11 = arith.constant 0 : index
    %9 = vector.load %arg3[%c26, %c0_11] : memref<32x128xf32, #tpu.memory_space<vmem>>, vector<1x16xf32>
    %c27 = arith.constant 27 : index
    %c0_12 = arith.constant 0 : index
    %10 = vector.load %arg3[%c27, %c0_12] : memref<32x128xf32, #tpu.memory_space<vmem>>, vector<1x16xf32>
    %c28 = arith.constant 28 : index
    %c0_13 = arith.constant 0 : index
    %11 = vector.load %arg3[%c28, %c0_13] : memref<32x128xf32, #tpu.memory_space<vmem>>, vector<1x16xf32>
    %c29 = arith.constant 29 : index
    %c0_14 = arith.constant 0 : index
    %12 = vector.load %arg3[%c29, %c0_14] : memref<32x128xf32, #tpu.memory_space<vmem>>, vector<1x5xf32>
    %cst = arith.constant 1.000000e+00 : f32
    %13 = vector.broadcast %cst : f32 to vector<1x16xf32>
    %cst_15 = arith.constant dense<0.000000e+00> : vector<16x16xf32>
    %14 = tpu.matmul %3, %4, %cst_15 {dimension_numbers = #tpu.dot_dimension_numbers<[1], [0], [0], [1], [0, 0, 1, 1], [], []>} : vector<16x8xf32>, vector<8x16xf32>, vector<16x16xf32> -> vector<16x16xf32>
    %15 = vector.broadcast %7 : vector<1x16xf32> to vector<16x16xf32>
    %16 = arith.addf %14, %15 : vector<16x16xf32>
    %cst_16 = arith.constant dense<0.000000e+00> : vector<16x16xf32>
    %17 = tpu.matmul %1, %16, %cst_16 {dimension_numbers = #tpu.dot_dimension_numbers<[1], [0], [0], [1], [0, 0, 1, 1], [], []>} : vector<16x16xf32>, vector<16x16xf32>, vector<16x16xf32> -> vector<16x16xf32>
    %18 = arith.mulf %17, %17 : vector<16x16xf32>
    %19 = tpu.concatenate %17, %18 in 1 : vector<16x16xf32>, vector<16x16xf32> -> vector<16x32xf32>
    %cst_17 = arith.constant dense<0.000000e+00> : vector<1x32xf32>
    %20 = tpu.matmul %13, %19, %cst_17 {dimension_numbers = #tpu.dot_dimension_numbers<[1], [0], [0], [1], [0, 0, 1, 1], [], []>} : vector<1x16xf32>, vector<16x32xf32>, vector<1x32xf32> -> vector<1x32xf32>
    %cst_18 = arith.constant 6.250000e-02 : f32
    %21 = vector.broadcast %cst_18 : f32 to vector<1x32xf32>
    %22 = arith.mulf %20, %21 : vector<1x32xf32>
    %23 = vector.extract_strided_slice %22 {offsets = [0, 0], sizes = [1, 16], strides = [1, 1]} : vector<1x32xf32> to vector<1x16xf32>
    %24 = vector.extract_strided_slice %22 {offsets = [0, 16], sizes = [1, 16], strides = [1, 1]} : vector<1x32xf32> to vector<1x16xf32>
    %25 = arith.mulf %23, %23 : vector<1x16xf32>
    %26 = arith.subf %24, %25 : vector<1x16xf32>
    %cst_19 = arith.constant 0.000000e+00 : f32
    %27 = vector.broadcast %cst_19 : f32 to vector<1x16xf32>
    %28 = arith.maximumf %26, %27 : vector<1x16xf32>
    %29 = vector.broadcast %23 : vector<1x16xf32> to vector<16x16xf32>
    %30 = arith.subf %17, %29 : vector<16x16xf32>
    %cst_20 = arith.constant 9.99999974E-6 : f32
    %31 = vector.broadcast %cst_20 : f32 to vector<1x16xf32>
    %32 = arith.addf %28, %31 : vector<1x16xf32>
    %33 = math.rsqrt %32 : vector<1x16xf32>
    %34 = vector.broadcast %33 : vector<1x16xf32> to vector<16x16xf32>
    %35 = arith.mulf %30, %34 : vector<16x16xf32>
    %36 = vector.broadcast %8 : vector<1x16xf32> to vector<16x16xf32>
    %37 = arith.mulf %35, %36 : vector<16x16xf32>
    %38 = vector.broadcast %9 : vector<1x16xf32> to vector<16x16xf32>
    %39 = arith.addf %37, %38 : vector<16x16xf32>
    %40 = math.tanh %39 : vector<16x16xf32>
    %cst_21 = arith.constant dense<0.000000e+00> : vector<16x16xf32>
    %41 = tpu.matmul %40, %5, %cst_21 {dimension_numbers = #tpu.dot_dimension_numbers<[1], [0], [0], [1], [0, 0, 1, 1], [], []>} : vector<16x16xf32>, vector<16x16xf32>, vector<16x16xf32> -> vector<16x16xf32>
    %cst_22 = arith.constant dense<0.000000e+00> : vector<16x16xf32>
    %42 = tpu.matmul %1, %41, %cst_22 {dimension_numbers = #tpu.dot_dimension_numbers<[1], [0], [0], [1], [0, 0, 1, 1], [], []>} : vector<16x16xf32>, vector<16x16xf32>, vector<16x16xf32> -> vector<16x16xf32>
    %43 = arith.mulf %42, %42 : vector<16x16xf32>
    %44 = tpu.concatenate %42, %43 in 1 : vector<16x16xf32>, vector<16x16xf32> -> vector<16x32xf32>
    %cst_23 = arith.constant dense<0.000000e+00> : vector<1x32xf32>
    %45 = tpu.matmul %13, %44, %cst_23 {dimension_numbers = #tpu.dot_dimension_numbers<[1], [0], [0], [1], [0, 0, 1, 1], [], []>} : vector<1x16xf32>, vector<16x32xf32>, vector<1x32xf32> -> vector<1x32xf32>
    %cst_24 = arith.constant 6.250000e-02 : f32
    %46 = vector.broadcast %cst_24 : f32 to vector<1x32xf32>
    %47 = arith.mulf %45, %46 : vector<1x32xf32>
    %48 = vector.extract_strided_slice %47 {offsets = [0, 0], sizes = [1, 16], strides = [1, 1]} : vector<1x32xf32> to vector<1x16xf32>
    %49 = vector.extract_strided_slice %47 {offsets = [0, 16], sizes = [1, 16], strides = [1, 1]} : vector<1x32xf32> to vector<1x16xf32>
    %50 = arith.mulf %48, %48 : vector<1x16xf32>
    %51 = arith.subf %49, %50 : vector<1x16xf32>
    %cst_25 = arith.constant 0.000000e+00 : f32
    %52 = vector.broadcast %cst_25 : f32 to vector<1x16xf32>
    %53 = arith.maximumf %51, %52 : vector<1x16xf32>
    %54 = vector.broadcast %48 : vector<1x16xf32> to vector<16x16xf32>
    %55 = arith.subf %42, %54 : vector<16x16xf32>
    %cst_26 = arith.constant 9.99999974E-6 : f32
    %56 = vector.broadcast %cst_26 : f32 to vector<1x16xf32>
    %57 = arith.addf %53, %56 : vector<1x16xf32>
    %58 = math.rsqrt %57 : vector<1x16xf32>
    %59 = vector.broadcast %58 : vector<1x16xf32> to vector<16x16xf32>
    %60 = arith.mulf %55, %59 : vector<16x16xf32>
    %61 = vector.broadcast %10 : vector<1x16xf32> to vector<16x16xf32>
    %62 = arith.mulf %60, %61 : vector<16x16xf32>
    %63 = vector.broadcast %11 : vector<1x16xf32> to vector<16x16xf32>
    %64 = arith.addf %62, %63 : vector<16x16xf32>
    %65 = math.tanh %64 : vector<16x16xf32>
    %cst_27 = arith.constant dense<0.000000e+00> : vector<1x16xf32>
    %66 = tpu.matmul %13, %65, %cst_27 {dimension_numbers = #tpu.dot_dimension_numbers<[1], [0], [0], [1], [0, 0, 1, 1], [], []>} : vector<1x16xf32>, vector<16x16xf32>, vector<1x16xf32> -> vector<1x16xf32>
    %cst_28 = arith.constant dense<0.000000e+00> : vector<1x5xf32>
    %67 = tpu.matmul %66, %6, %cst_28 {dimension_numbers = #tpu.dot_dimension_numbers<[1], [0], [0], [1], [0, 0, 1, 1], [], []>} : vector<1x16xf32>, vector<16x5xf32>, vector<1x5xf32> -> vector<1x5xf32>
    %68 = arith.addf %67, %12 : vector<1x5xf32>
    %cst_29 = arith.constant 0.000000e+00 : f32
    %69 = vector.broadcast %cst_29 : f32 to vector<1x123xf32>
    %70 = tpu.concatenate %68, %69 in 1 : vector<1x5xf32>, vector<1x123xf32> -> vector<1x128xf32>
    %c0_30 = arith.constant 0 : index
    %c0_31 = arith.constant 0 : index
    %c0_32 = arith.constant 0 : index
    %71 = vector.load %arg4[%c0_30, %c0_31, %c0_32] : memref<1x1x128xf32, #tpu.memory_space<vmem>>, vector<1x1x128xf32>
    %72 = vector.shape_cast %71 : vector<1x1x128xf32> to vector<1x128xf32>
    %73 = vector.shape_cast %70 : vector<1x128xf32> to vector<1x1x128xf32>
    tpu.vector_store %arg4[%c0_30, %c0_31, %c0_32], %73 {strides = array<i32>} : memref<1x1x128xf32, #tpu.memory_space<vmem>>, vector<1x1x128xf32>,
    return
  }
  func.func @transform_0(%arg0: i32) -> (i32, i32, i32) {
    %c0_i32 = arith.constant 0 : i32
    %c0_i32_0 = arith.constant 0 : i32
    %c0_i32_1 = arith.constant 0 : i32
    return %arg0, %c0_i32, %c0_i32_0 : i32, i32, i32
  }
  func.func @transform_1(%arg0: i32) -> (i32, i32, i32) {
    %c0_i32 = arith.constant 0 : i32
    %c0_i32_0 = arith.constant 0 : i32
    %c0_i32_1 = arith.constant 0 : i32
    return %arg0, %c0_i32, %c0_i32_0 : i32, i32, i32
  }
  func.func @transform_2(%arg0: i32) -> (i32, i32) {
    %c0_i32 = arith.constant 0 : i32
    %c0_i32_0 = arith.constant 0 : i32
    %c0_i32_1 = arith.constant 0 : i32
    return %c0_i32, %c0_i32_0 : i32, i32
  }
  func.func @transform_3(%arg0: i32) -> (i32, i32, i32) {
    %c0_i32 = arith.constant 0 : i32
    %c0_i32_0 = arith.constant 0 : i32
    %c0_i32_1 = arith.constant 0 : i32
    return %arg0, %c0_i32, %c0_i32_0 : i32, i32, i32
  }
}

</mosaic_0001>

<llo_original>
// kernel: tpu_custom_call.1
$region0: #{tpu_custom_call.1}
  #allocation0 [shape = 'u32[]', space=smem, size = 0x4, offset = 0x4, fixed_abs, tag = 'smem constant byte address 0x4 - core index']
  #allocation1 [shape = 'u32[144,128]{1,0:T(1,128)}', space=vmem, size = 0x12000, scoped, tag = 'internal scratch']
  %s0 = inlined_call_operand.vmem [shape: f32[2,16,16], index: 0, kind: input, shape index: {}]
  %s1 = inlined_call_operand.vmem [shape: f32[2,16,8], index: 1, kind: input, shape index: {}]
  %s2 = inlined_call_operand.hbm [shape: f32[32,128], index: 2, kind: input, shape index: {}]
  %s3 = inlined_call_operand.hbm [shape: f32[2,1,128], index: 3, kind: output, shape index: {}]
  %s4 = sld [smem:[#allocation0]]
  $region49: #{tpu_custom_call.1} parent=0
    _
  %s6 = ssub.s32 1, %s4
  %s7 = scalar_select 0, %s6, %s4
  $region1: #{tpu_custom_call.1} parent=0
    #allocation2 [shape = 'u8[16384]{0}', space=vmem, size = 0x4000, scoped, tag = 'input window, operand 2, single buffered']
    #allocation3 [shape = 's32[2]{0}', space=sflag, size = 0x8, scoped, tag = 'scoped memory for tpu_custom_call.1']
    #allocation4 [shape = 's32[2]{0}', space=sflag, size = 0x8, scoped, tag = 'scoped memory for tpu_custom_call.1']
    #allocation5 [shape = 'u8[1024]{0}', space=vmem, size = 0x400, scoped, tag = 'output window, operand 0']
    %8 = vsyncpa [#allocation3], 0
    %9 = vsyncpa [#allocation4], 0
    %s10 = scalar_lea.sflag [#allocation4], 1
    %11 = vsyncpa %s10, 0
    loop: start=0, step=1, limit=4
    $region2: #{tpu_custom_call.1} parent=1 // loop_pre_header
      _
    $region3: #{tpu_custom_call.1} parent=1 // loop_header
      %s13 = sphi 0, %s17
      %p14 = scmp.ge.s32.totalorder %s13, 4
      %s23 = sphi 0, %s25
      %s26 = sphi 0, %s23
      %s27 = sphi 0, %s26
      %s43 = sphi 0, %s27
      %s49 = sphi 0, %s51
      %s52 = sphi 0, %s49
      %s53 = sphi 0, %s52
      %s69 = sphi 0, %s53
      %s73 = sphi 0, %s73
      %s75 = sphi 0, %s73
      %s76 = sphi 0, %s75
      %s90 = sphi 0, %s76
      %s96 = sphi 0, %s98
      %s99 = sphi 0, %s96
      %s100 = sphi 0, %s99
      %s116 = sphi 0, %s100
    $region4: #{tpu_custom_call.1} parent=1 // loop_header_branch
      %16 = sbr.rel (%p14) target = $region8
    $region5: #{tpu_custom_call.1} parent=1 // loop_body
      %s18 = ssub.s32 %s13, 1
      %s19 = ssub.s32 %s13, 2
      %s20 = sadd.s32 %s13, 1
      %s21 = ssub.s32 %s13, %s20
      %p22 = scmp.eq.s32.totalorder %s21, 0
      %s24 = sadd.s32 %s23, 1
      %s25 = scalar_select %p22, %s23, %s24
      %p28 = pneg %p22
      %p29 = scmp.eq.s32.totalorder %s13, 1
      %p30 = por %p28, %p29
      %p31 = scmp.ne.s32.totalorder %s23, %s26
      %p32 = scmp.eq.s32.totalorder %s13, 0
      %p33 = por %p31, %p32
      %p34 = scmp.ne.s32.totalorder %s23, %s26
      %p35 = scmp.eq.s32.totalorder %s18, 1
      %p36 = por %p34, %p35
      %p37 = scmp.ne.s32.totalorder %s26, %s27
      %p38 = scmp.eq.s32.totalorder %s18, 0
      %p39 = por %p37, %p38
      %p40 = scmp.ne.s32.totalorder %s26, %s27
      %p41 = scmp.eq.s32.totalorder %s19, 1
      %p42 = por %p40, %p41
      %p44 = scmp.ne.s32.totalorder %s27, %s43
      %p45 = scmp.eq.s32.totalorder %s19, 0
      %p46 = por %p44, %p45
      %s47 = ssub.s32 %s13, %s20
      %p48 = scmp.eq.s32.totalorder %s47, 0
      %s50 = sadd.s32 %s49, 1
      %s51 = scalar_select %p48, %s49, %s50
      %p54 = pneg %p48
      %p55 = scmp.eq.s32.totalorder %s13, 1
      %p56 = por %p54, %p55
      %p57 = scmp.ne.s32.totalorder %s49, %s52
      %p58 = scmp.eq.s32.totalorder %s13, 0
      %p59 = por %p57, %p58
      %p60 = scmp.ne.s32.totalorder %s49, %s52
      %p61 = scmp.eq.s32.totalorder %s18, 1
      %p62 = por %p60, %p61
      %p63 = scmp.ne.s32.totalorder %s52, %s53
      %p64 = scmp.eq.s32.totalorder %s18, 0
      %p65 = por %p63, %p64
      %p66 = scmp.ne.s32.totalorder %s52, %s53
      %p67 = scmp.eq.s32.totalorder %s19, 1
      %p68 = por %p66, %p67
      %p70 = scmp.ne.s32.totalorder %s53, %s69
      %p71 = scmp.eq.s32.totalorder %s19, 0
      %p72 = por %p70, %p71
      %s74 = sadd.s32 %s73, 1
      %p77 = scmp.eq.s32.totalorder %s13, 1
      %p78 = scmp.ne.s32.totalorder %s73, %s75
      %p79 = scmp.eq.s32.totalorder %s13, 0
      %p80 = por %p78, %p79
      %p81 = scmp.ne.s32.totalorder %s73, %s75
      %p82 = scmp.eq.s32.totalorder %s18, 1
      %p83 = por %p81, %p82
      %p84 = scmp.ne.s32.totalorder %s75, %s76
      %p85 = scmp.eq.s32.totalorder %s18, 0
      %p86 = por %p84, %p85
      %p87 = scmp.ne.s32.totalorder %s75, %s76
      %p88 = scmp.eq.s32.totalorder %s19, 1
      %p89 = por %p87, %p88
      %p91 = scmp.ne.s32.totalorder %s76, %s90
      %p92 = scmp.eq.s32.totalorder %s19, 0
      %p93 = por %p91, %p92
      %s94 = ssub.s32 %s13, %s20
      %p95 = scmp.eq.s32.totalorder %s94, 0
      %s97 = sadd.s32 %s96, 1
      %s98 = scalar_select %p95, %s96, %s97
      %p101 = pneg %p95
      %p102 = scmp.eq.s32.totalorder %s13, 1
      %p103 = por %p101, %p102
      %p104 = scmp.ne.s32.totalorder %s96, %s99
      %p105 = scmp.eq.s32.totalorder %s13, 0
      %p106 = por %p104, %p105
      %p107 = scmp.ne.s32.totalorder %s96, %s99
      %p108 = scmp.eq.s32.totalorder %s18, 1
      %p109 = por %p107, %p108
      %p110 = scmp.ne.s32.totalorder %s99, %s100
      %p111 = scmp.eq.s32.totalorder %s18, 0
      %p112 = por %p110, %p111
      %p113 = scmp.ne.s32.totalorder %s99, %s100
      %p114 = scmp.eq.s32.totalorder %s19, 1
      %p115 = por %p113, %p114
      %p117 = scmp.ne.s32.totalorder %s100, %s116
      %p118 = scmp.eq.s32.totalorder %s19, 0
      %p119 = por %p117, %p118
      %p120 = scmp.le.s32.totalorder 1, %s13
      %p121 = scmp.lt.s32.totalorder %s13, 3
      %p122 = pnand %p120, %p121
      %p123 = pneg %p122
      // Predicated region
      $region9: #{tpu_custom_call.1} parent=5 // pred_check
        _
      $region10: #{tpu_custom_call.1} parent=5 // pred_check_branch
        %125 = sbr.rel (%p122) target = $region12
      $region11: #{tpu_custom_call.1} parent=5 // pred_region
        %s126 = ssub.s32 %s13, 1
        // Predicated region
        $region13: #{tpu_custom_call.1} parent=11 // pred_check
          %p127 = pneg %p86
        $region14: #{tpu_custom_call.1} parent=11 // pred_check_branch
          %129 = sbr.rel (%p127) target = $region16
        $region15: #{tpu_custom_call.1} parent=11 // pred_region
          %s131 = ssub.s32 512, 512
          %132 = vsyncadd [#allocation3], %s131
          %s133 = sshll.u32 [#allocation2], 4
          %s134 = int_to_ptr.vmem [resolvable:$true] %s133
          %139 = dma.hbm_to_vmem [thread:$0]  %s2, 512, %s134, [#allocation3], 128, 128, 8
        $region16: #{tpu_custom_call.1} parent=11 // pred_fallthru
          _
      $region12: #{tpu_custom_call.1} parent=5 // pred_fallthru
        _
      %p140 = scmp.lt.s32.totalorder %s13, 2
      // Predicated region
      $region17: #{tpu_custom_call.1} parent=5 // pred_check
        %p141 = pneg %p140
      $region18: #{tpu_custom_call.1} parent=5 // pred_check_branch
        %143 = sbr.rel (%p141) target = $region20
      $region19: #{tpu_custom_call.1} parent=5 // pred_region
        // Predicated region
        $region21: #{tpu_custom_call.1} parent=19 // pred_check
          %p144 = pneg %p33
        $region22: #{tpu_custom_call.1} parent=19 // pred_check_branch
          %146 = sbr.rel (%p144) target = $region24
        $region23: #{tpu_custom_call.1} parent=19 // pred_region
          %p147 = scmp.lt.s32.totalorder %s13, 1
          %s148 = scalar_select %p147, %s13, 1
          %s149 = smul.addr %s148, 2
          %s150 = smul.addr %s149, 8
          %s151 = scalar_lea.vmem %s0, %s150
        $region24: #{tpu_custom_call.1} parent=19 // pred_fallthru
          _
        // Predicated region
        $region25: #{tpu_custom_call.1} parent=19 // pred_check
          %p152 = pneg %p59
        $region26: #{tpu_custom_call.1} parent=19 // pred_check_branch
          %154 = sbr.rel (%p152) target = $region28
        $region27: #{tpu_custom_call.1} parent=19 // pred_region
          %p155 = scmp.lt.s32.totalorder %s13, 1
          %s156 = scalar_select %p155, %s13, 1
          %s157 = smul.addr %s156, 2
          %s158 = smul.addr %s157, 8
          %s159 = scalar_lea.vmem %s1, %s158
        $region28: #{tpu_custom_call.1} parent=19 // pred_fallthru
          _
      $region20: #{tpu_custom_call.1} parent=5 // pred_fallthru
        _
      %p160 = scmp.le.s32.totalorder 1, %s13
      %p161 = scmp.lt.s32.totalorder %s13, 3
      %p162 = pnand %p160, %p161
      %p163 = pneg %p162
      // Predicated region
      $region29: #{tpu_custom_call.1} parent=5 // pred_check
        _
      $region30: #{tpu_custom_call.1} parent=5 // pred_check_branch
        %165 = sbr.rel (%p162) target = $region32
      $region31: #{tpu_custom_call.1} parent=5 // pred_region
        %s166 = ssub.s32 %s13, 1
        // Predicated region
        $region33: #{tpu_custom_call.1} parent=31 // pred_check
          %p167 = pneg %p86
        $region34: #{tpu_custom_call.1} parent=31 // pred_check_branch
          %169 = sbr.rel (%p167) target = $region36
        $region35: #{tpu_custom_call.1} parent=31 // pred_region
          %170 = dma.done [#allocation3], 512
        $region36: #{tpu_custom_call.1} parent=31 // pred_fallthru
          _
        %p171 = scmp.lt.s32.totalorder %s18, 1
        %s172 = scalar_select %p171, %s18, 1
        %s173 = smul.addr %s172, 2
        %s174 = smul.addr %s173, 8
        %s175 = scalar_lea.vmem %s0, %s174
        %p176 = pneg %p39
        %p177 = pneg %p36
        %p178 = scmp.lt.s32.totalorder %s18, 1
        %s179 = scalar_select %p178, %s18, 1
        %s180 = smul.addr %s179, 2
        %s181 = smul.addr %s180, 8
        %s182 = scalar_lea.vmem %s1, %s181
        %p183 = pneg %p65
        %p184 = pneg %p62
        %p185 = pneg %p86
        %p186 = pneg %p83
        %p187 = pneg %p112
        %p188 = pneg %p109
        %s189 = sand.u32 %s99, 1
        %s190 = scalar_lea.sflag [#allocation4], %s189
        %s191 = sand.u32 %s99, 1
        %s192 = scalar_lea.vmem [#allocation5], %s191
        %p193 = scmp.lt.s32.totalorder %s18, 1
        %s194 = scalar_select %p193, %s18, 1
        %s195 = smul.addr %s194, 2
        %s196 = smul.addr %s195, 8
        %s197 = scalar_lea.vmem %s0, %s196
        %p198 = scmp.lt.s32.totalorder %s18, 1
        %s199 = scalar_select %p198, %s18, 1
        %s200 = smul.addr %s199, 2
        %s201 = smul.addr %s200, 8
        %s202 = scalar_lea.vmem %s1, %s201
        %v203 = vld [vmem:[%s197] sm:$0xff]
        %v204 = vld [vmem:[%s197 + $0x8] sm:$0xff]
        %v205 = vld [vmem:[%s202] sm:$0xff]
        %v206 = vld [vmem:[%s202 + $0x8] sm:$0xff]
        %v207 = vld [vmem:[#allocation2] sm:$0xff]
        %v208 = vld [vmem:[#allocation2 + $0x8] sm:$0xff]
        %v209 = vld [vmem:[#allocation2 + $0x10] sm:$0xff]
        %v210 = vld [vmem:[#allocation2 + $0x18] sm:$0x1]
        %v211 = vld [vmem:[#allocation2 + $0x19] sm:$0x1]
        %v212 = vld [vmem:[#allocation2 + $0x1a] sm:$0x1]
        %v213 = vld [vmem:[#allocation2 + $0x1b] sm:$0x1]
        %v214 = vld [vmem:[#allocation2 + $0x1c] sm:$0x1]
        %v215 = vld [vmem:[#allocation2 + $0x1d] sm:$0x1]
        %v216 = vlaneseq
        %v217 = vshrl.u32 %v216, 7
        %v218 = vsub.s32 0, %v217
        %v219 = vrot.slane %v210, %v218
        %vm220 = vcmask 64512
        %v222 = vsel %vm220, %v205, 0
        %v225 = vsel %vm220, %v206, 0
        %227 = vmatprep.subr.mxu0 0.0
        %228 = vmatpush1.msra.mxu0 0.0
        %229 = vmatprep.subr.mxu0 0.0
        %230 = vmatpush1.msra.mxu0 0.0
        %231 = vmatprep.subr.mxu0 0.0
        %232 = vmatpush1.msra.mxu0 0.0
        %233 = vmatprep.subr.mxu0 0.0
        %234 = vmatpush1.msra.mxu0 0.0
        %235 = vmatprep.subr.mxu0 0.0
        %236 = vmatpush1.msra.mxu0 0.0
        %237 = vmatprep.subr.mxu0 0.0
        %238 = vmatpush1.msra.mxu0 0.0
        %239 = vmatprep.subr.mxu0 0.0
        %240 = vmatpush1.msra.mxu0 0.0
        %241 = vmatprep.subr.mxu0 0.0
        %242 = vmatpush1.msra.mxu0 0.0
        %243 = vmatprep.subr.mxu0 0.0
        %244 = vmatpush1.msra.mxu0 0.0
        %245 = vmatprep.subr.mxu0 0.0
        %246 = vmatpush1.msra.mxu0 0.0
        %247 = vmatprep.subr.mxu0 0.0
        %248 = vmatpush1.msra.mxu0 0.0
        %249 = vmatprep.subr.mxu0 0.0
        %250 = vmatpush1.msra.mxu0 0.0
        %251 = vmatprep.subr.mxu0 0.0
        %252 = vmatpush1.msra.mxu0 0.0
        %253 = vmatprep.subr.mxu0 0.0
        %254 = vmatpush1.msra.mxu0 0.0
        %255 = vmatprep.subr.mxu0 0.0
        %256 = vmatpush1.msra.mxu0 0.0
        %257 = vmatprep.subr.mxu0 0.0
        %258 = vmatpush1.msra.mxu0 %v207
        %259 = vmatprep.subr.mxu0 0.0
        %260 = vmatpush2.msra.mxu0 0.0
        %261 = vmatprep.subr.mxu0 0.0
        %262 = vmatpush2.msra.mxu0 0.0
        %263 = vmatprep.subr.mxu0 0.0
        %264 = vmatpush2.msra.mxu0 0.0
        %265 = vmatprep.subr.mxu0 0.0
        %266 = vmatpush2.msra.mxu0 0.0
        %267 = vmatprep.subr.mxu0 0.0
        %268 = vmatpush2.msra.mxu0 0.0
        %269 = vmatprep.subr.mxu0 0.0
        %270 = vmatpush2.msra.mxu0 0.0
        %271 = vmatprep.subr.mxu0 0.0
        %272 = vmatpush2.msra.mxu0 0.0
        %273 = vmatprep.subr.mxu0 0.0
        %274 = vmatpush2.msra.mxu0 0.0
        %275 = vmatprep.subr.mxu0 0.0
        %276 = vmatpush2.msra.mxu0 0.0
        %277 = vmatprep.subr.mxu0 0.0
        %278 = vmatpush2.msra.mxu0 0.0
        %279 = vmatprep.subr.mxu0 0.0
        %280 = vmatpush2.msra.mxu0 0.0
        %281 = vmatprep.subr.mxu0 0.0
        %282 = vmatpush2.msra.mxu0 0.0
        %283 = vmatprep.subr.mxu0 0.0
        %284 = vmatpush2.msra.mxu0 0.0
        %285 = vmatprep.subr.mxu0 0.0
        %286 = vmatpush2.msra.mxu0 0.0
        %287 = vmatprep.subr.mxu0 0.0
        %288 = vmatpush2.msra.mxu0 0.0
        %289 = vmatprep.subr.mxu0 0.0
        %290 = vmatpush2.msra.mxu0 0.0
        %291 = vmatprep.mubr.f32.mxu0 0.0
        %292 = vmatmul.mubr.f32.gmra.mxu0 %v222
        %v293 = vpop.f32.mrf.mxu0
        %v294 = vadd.f32 %v219, %v293
        %v295 = vpop.f32.mrf.mxu0
        %296 = vmatprep.mubr.f32.mxu0 0.0
        %297 = vmatmul.mubr.f32.gmra.mxu0 %v225
        %v298 = vpop.f32.mrf.mxu0
        %v299 = vadd.f32 %v219, %v298
        %v300 = vpop.f32.mrf.mxu0
        %301 = vdwg.mxu0
        %vm302 = vcmask 130048
        %v304 = vsel %vm302, %v203, 0
        %v307 = vsel %vm302, %v204, 0
        %309 = vmatprep.subr.mxu0 0.0
        %310 = vmatpush1.msra.mxu0 0.0
        %311 = vmatprep.subr.mxu0 0.0
        %312 = vmatpush1.msra.mxu0 0.0
        %313 = vmatprep.subr.mxu0 0.0
        %314 = vmatpush1.msra.mxu0 0.0
        %315 = vmatprep.subr.mxu0 0.0
        %316 = vmatpush1.msra.mxu0 0.0
        %317 = vmatprep.subr.mxu0 0.0
        %318 = vmatpush1.msra.mxu0 0.0
        %319 = vmatprep.subr.mxu0 0.0
        %320 = vmatpush1.msra.mxu0 0.0
        %321 = vmatprep.subr.mxu0 0.0
        %322 = vmatpush1.msra.mxu0 0.0
        %323 = vmatprep.subr.mxu0 0.0
        %324 = vmatpush1.msra.mxu0 0.0
        %325 = vmatprep.subr.mxu0 0.0
        %326 = vmatpush1.msra.mxu0 0.0
        %327 = vmatprep.subr.mxu0 0.0
        %328 = vmatpush1.msra.mxu0 0.0
        %329 = vmatprep.subr.mxu0 0.0
        %330 = vmatpush1.msra.mxu0 0.0
        %331 = vmatprep.subr.mxu0 0.0
        %332 = vmatpush1.msra.mxu0 0.0
        %333 = vmatprep.subr.mxu0 0.0
        %334 = vmatpush1.msra.mxu0 0.0
        %335 = vmatprep.subr.mxu0 0.0
        %336 = vmatpush1.msra.mxu0 0.0
        %337 = vmatprep.subr.mxu0 0.0
        %338 = vmatpush1.msra.mxu0 %v299
        %339 = vmatprep.subr.mxu0 0.0
        %340 = vmatpush1.msra.mxu0 %v294
        %341 = vmatprep.subr.mxu0 0.0
        %342 = vmatpush2.msra.mxu0 0.0
        %343 = vmatprep.subr.mxu0 0.0
        %344 = vmatpush2.msra.mxu0 0.0
        %345 = vmatprep.subr.mxu0 0.0
        %346 = vmatpush2.msra.mxu0 0.0
        %347 = vmatprep.subr.mxu0 0.0
        %348 = vmatpush2.msra.mxu0 0.0
        %349 = vmatprep.subr.mxu0 0.0
        %350 = vmatpush2.msra.mxu0 0.0
        %351 = vmatprep.subr.mxu0 0.0
        %352 = vmatpush2.msra.mxu0 0.0
        %353 = vmatprep.subr.mxu0 0.0
        %354 = vmatpush2.msra.mxu0 0.0
        %355 = vmatprep.subr.mxu0 0.0
        %356 = vmatpush2.msra.mxu0 0.0
        %357 = vmatprep.subr.mxu0 0.0
        %358 = vmatpush2.msra.mxu0 0.0
        %359 = vmatprep.subr.mxu0 0.0
        %360 = vmatpush2.msra.mxu0 0.0
        %361 = vmatprep.subr.mxu0 0.0
        %362 = vmatpush2.msra.mxu0 0.0
        %363 = vmatprep.subr.mxu0 0.0
        %364 = vmatpush2.msra.mxu0 0.0
        %365 = vmatprep.subr.mxu0 0.0
        %366 = vmatpush2.msra.mxu0 0.0
        %367 = vmatprep.subr.mxu0 0.0
        %368 = vmatpush2.msra.mxu0 0.0
        %369 = vmatprep.subr.mxu0 0.0
        %370 = vmatpush2.msra.mxu0 0.0
        %371 = vmatprep.subr.mxu0 0.0
        %372 = vmatpush2.msra.mxu0 0.0
        %373 = vmatprep.mubr.f32.mxu0 0.0
        %374 = vmatmul.mubr.f32.gmra.mxu0 %v304
        %v375 = vpop.f32.mrf.mxu0
        %v376 = vadd.f32 0.0, %v375
        %v377 = vpop.f32.mrf.mxu0
        %378 = vmatprep.mubr.f32.mxu0 0.0
        %379 = vmatmul.mubr.f32.gmra.mxu0 %v307
        %v380 = vpop.f32.mrf.mxu0
        %v381 = vadd.f32 0.0, %v380
        %v382 = vpop.f32.mrf.mxu0
        %383 = vdwg.mxu0
        %v384 = vmul.f32 %v376, %v376
        %v385 = vmul.f32 %v381, %v381
        %388 = vrot.lane.b32.xlu0 %v384, 16
        %v389 = vpop.permute.xlu0 %388
        %390 = vrot.lane.b32.xlu0 %v385, 16
        %v391 = vpop.permute.xlu0 %390
        %v394 = vsel %vm302, %v376, %v389
        %v395 = vsel %vm302, %v381, %v391
        %v397 = vsel %vm302, 1.0, 0
        %399 = vmatprep.subr.mxu0 0.0
        %400 = vmatpush1.msra.mxu0 0.0
        %401 = vmatprep.subr.mxu0 0.0
        %402 = vmatpush1.msra.mxu0 0.0
        %403 = vmatprep.subr.mxu0 0.0
        %404 = vmatpush1.msra.mxu0 0.0
        %405 = vmatprep.subr.mxu0 0.0
        %406 = vmatpush1.msra.mxu0 0.0
        %407 = vmatprep.subr.mxu0 0.0
        %408 = vmatpush1.msra.mxu0 0.0
        %409 = vmatprep.subr.mxu0 0.0
        %410 = vmatpush1.msra.mxu0 0.0
        %411 = vmatprep.subr.mxu0 0.0
        %412 = vmatpush1.msra.mxu0 0.0
        %413 = vmatprep.subr.mxu0 0.0
        %414 = vmatpush1.msra.mxu0 0.0
        %415 = vmatprep.subr.mxu0 0.0
        %416 = vmatpush1.msra.mxu0 0.0
        %417 = vmatprep.subr.mxu0 0.0
        %418 = vmatpush1.msra.mxu0 0.0
        %419 = vmatprep.subr.mxu0 0.0
        %420 = vmatpush1.msra.mxu0 0.0
        %421 = vmatprep.subr.mxu0 0.0
        %422 = vmatpush1.msra.mxu0 0.0
        %423 = vmatprep.subr.mxu0 0.0
        %424 = vmatpush1.msra.mxu0 0.0
        %425 = vmatprep.subr.mxu0 0.0
        %426 = vmatpush1.msra.mxu0 0.0
        %427 = vmatprep.subr.mxu0 0.0
        %428 = vmatpush1.msra.mxu0 %v395
        %429 = vmatprep.subr.mxu0 0.0
        %430 = vmatpush1.msra.mxu0 %v394
        %431 = vmatprep.subr.mxu0 0.0
        %432 = vmatpush2.msra.mxu0 0.0
        %433 = vmatprep.subr.mxu0 0.0
        %434 = vmatpush2.msra.mxu0 0.0
        %435 = vmatprep.subr.mxu0 0.0
        %436 = vmatpush2.msra.mxu0 0.0
        %437 = vmatprep.subr.mxu0 0.0
        %438 = vmatpush2.msra.mxu0 0.0
        %439 = vmatprep.subr.mxu0 0.0
        %440 = vmatpush2.msra.mxu0 0.0
        %441 = vmatprep.subr.mxu0 0.0
        %442 = vmatpush2.msra.mxu0 0.0
        %443 = vmatprep.subr.mxu0 0.0
        %444 = vmatpush2.msra.mxu0 0.0
        %445 = vmatprep.subr.mxu0 0.0
        %446 = vmatpush2.msra.mxu0 0.0
        %447 = vmatprep.subr.mxu0 0.0
        %448 = vmatpush2.msra.mxu0 0.0
        %449 = vmatprep.subr.mxu0 0.0
        %450 = vmatpush2.msra.mxu0 0.0
        %451 = vmatprep.subr.mxu0 0.0
        %452 = vmatpush2.msra.mxu0 0.0
        %453 = vmatprep.subr.mxu0 0.0
        %454 = vmatpush2.msra.mxu0 0.0
        %455 = vmatprep.subr.mxu0 0.0
        %456 = vmatpush2.msra.mxu0 0.0
        %457 = vmatprep.subr.mxu0 0.0
        %458 = vmatpush2.msra.mxu0 0.0
        %459 = vmatprep.subr.mxu0 0.0
        %460 = vmatpush2.msra.mxu0 0.0
        %461 = vmatprep.subr.mxu0 0.0
        %462 = vmatpush2.msra.mxu0 0.0
        %463 = vmatprep.mubr.f32.mxu0 0.0
        %464 = vmatmul.mubr.f32.gmra.mxu0 %v397
        %v465 = vpop.f32.mrf.mxu0
        %v466 = vadd.f32 0.0, %v465
        %v467 = vpop.f32.mrf.mxu0
        %468 = vdwg.mxu0
        %v469 = vmul.f32 %v466, 0.0625
        %v470 = vmul.f32 %v469, %v469
        %472 = vrot.lane.b32.xlu0 %v470, 16
        %v473 = vpop.permute.xlu0 %472
        %v475 = vsub.f32 %v469, %v473
        %v476 = vmax.f32 %v475, 0.0
        %v477 = vlaneseq
        %v478 = vshrl.u32 %v477, 7
        %v479 = vsub.s32 0, %v478
        %v480 = vrot.slane %v469, %v479
        %v481 = vsub.f32 %v376, %v480
        %v482 = vsub.f32 %v381, %v480
        %v483 = vadd.f32 %v476, 1e-05
        %v484 = vrsqrt.pop %v483
        %v485 = vlaneseq
        %v486 = vshrl.u32 %v485, 7
        %v487 = vsub.s32 0, %v486
        %v488 = vrot.slane %v484, %v487
        %490 = vrot.lane.b32.xlu0 %v488, 112
        %v491 = vpop.permute.xlu0 %490
        %v493 = vmul.f32 %v481, %v491
        %v494 = vmul.f32 %v482, %v491
        %v495 = vlaneseq
        %v496 = vshrl.u32 %v495, 7
        %v497 = vsub.s32 0, %v496
        %v498 = vrot.slane %v211, %v497
        %v499 = vmul.f32 %v493, %v498
        %v500 = vmul.f32 %v494, %v498
        %v501 = vlaneseq
        %v502 = vshrl.u32 %v501, 7
        %v503 = vsub.s32 0, %v502
        %v504 = vrot.slane %v212, %v503
        %v505 = vadd.f32 %v499, %v504
        %v506 = vadd.f32 %v500, %v504
        %v507 = vtanh.pop %v505
        %v508 = vtanh.pop %v506
        %v510 = vsel %vm302, %v507, 0
        %v513 = vsel %vm302, %v508, 0
        %515 = vmatprep.subr.mxu0 0.0
        %516 = vmatpush1.msra.mxu0 0.0
        %517 = vmatprep.subr.mxu0 0.0
        %518 = vmatpush1.msra.mxu0 0.0
        %519 = vmatprep.subr.mxu0 0.0
        %520 = vmatpush1.msra.mxu0 0.0
        %521 = vmatprep.subr.mxu0 0.0
        %522 = vmatpush1.msra.mxu0 0.0
        %523 = vmatprep.subr.mxu0 0.0
        %524 = vmatpush1.msra.mxu0 0.0
        %525 = vmatprep.subr.mxu0 0.0
        %526 = vmatpush1.msra.mxu0 0.0
        %527 = vmatprep.subr.mxu0 0.0
        %528 = vmatpush1.msra.mxu0 0.0
        %529 = vmatprep.subr.mxu0 0.0
        %530 = vmatpush1.msra.mxu0 0.0
        %531 = vmatprep.subr.mxu0 0.0
        %532 = vmatpush1.msra.mxu0 0.0
        %533 = vmatprep.subr.mxu0 0.0
        %534 = vmatpush1.msra.mxu0 0.0
        %535 = vmatprep.subr.mxu0 0.0
        %536 = vmatpush1.msra.mxu0 0.0
        %537 = vmatprep.subr.mxu0 0.0
        %538 = vmatpush1.msra.mxu0 0.0
        %539 = vmatprep.subr.mxu0 0.0
        %540 = vmatpush1.msra.mxu0 0.0
        %541 = vmatprep.subr.mxu0 0.0
        %542 = vmatpush1.msra.mxu0 0.0
        %543 = vmatprep.subr.mxu0 0.0
        %544 = vmatpush1.msra.mxu0 %v209
        %545 = vmatprep.subr.mxu0 0.0
        %546 = vmatpush1.msra.mxu0 %v208
        %547 = vmatprep.subr.mxu0 0.0
        %548 = vmatpush2.msra.mxu0 0.0
        %549 = vmatprep.subr.mxu0 0.0
        %550 = vmatpush2.msra.mxu0 0.0
        %551 = vmatprep.subr.mxu0 0.0
        %552 = vmatpush2.msra.mxu0 0.0
        %553 = vmatprep.subr.mxu0 0.0
        %554 = vmatpush2.msra.mxu0 0.0
        %555 = vmatprep.subr.mxu0 0.0
        %556 = vmatpush2.msra.mxu0 0.0
        %557 = vmatprep.subr.mxu0 0.0
        %558 = vmatpush2.msra.mxu0 0.0
        %559 = vmatprep.subr.mxu0 0.0
        %560 = vmatpush2.msra.mxu0 0.0
        %561 = vmatprep.subr.mxu0 0.0
        %562 = vmatpush2.msra.mxu0 0.0
        %563 = vmatprep.subr.mxu0 0.0
        %564 = vmatpush2.msra.mxu0 0.0
        %565 = vmatprep.subr.mxu0 0.0
        %566 = vmatpush2.msra.mxu0 0.0
        %567 = vmatprep.subr.mxu0 0.0
        %568 = vmatpush2.msra.mxu0 0.0
        %569 = vmatprep.subr.mxu0 0.0
        %570 = vmatpush2.msra.mxu0 0.0
        %571 = vmatprep.subr.mxu0 0.0
        %572 = vmatpush2.msra.mxu0 0.0
        %573 = vmatprep.subr.mxu0 0.0
        %574 = vmatpush2.msra.mxu0 0.0
        %575 = vmatprep.subr.mxu0 0.0
        %576 = vmatpush2.msra.mxu0 0.0
        %577 = vmatprep.subr.mxu0 0.0
        %578 = vmatpush2.msra.mxu0 0.0
        %579 = vmatprep.mubr.f32.mxu0 0.0
        %580 = vmatmul.mubr.f32.gmra.mxu0 %v510
        %v581 = vpop.f32.mrf.mxu0
        %v582 = vadd.f32 0.0, %v581
        %v583 = vpop.f32.mrf.mxu0
        %584 = vmatprep.mubr.f32.mxu0 0.0
        %585 = vmatmul.mubr.f32.gmra.mxu0 %v513
        %v586 = vpop.f32.mrf.mxu0
        %v587 = vadd.f32 0.0, %v586
        %v588 = vpop.f32.mrf.mxu0
        %589 = vdwg.mxu0
        %590 = vmatprep.subr.mxu0 0.0
        %591 = vmatpush1.msra.mxu0 0.0
        %592 = vmatprep.subr.mxu0 0.0
        %593 = vmatpush1.msra.mxu0 0.0
        %594 = vmatprep.subr.mxu0 0.0
        %595 = vmatpush1.msra.mxu0 0.0
        %596 = vmatprep.subr.mxu0 0.0
        %597 = vmatpush1.msra.mxu0 0.0
        %598 = vmatprep.subr.mxu0 0.0
        %599 = vmatpush1.msra.mxu0 0.0
        %600 = vmatprep.subr.mxu0 0.0
        %601 = vmatpush1.msra.mxu0 0.0
        %602 = vmatprep.subr.mxu0 0.0
        %603 = vmatpush1.msra.mxu0 0.0
        %604 = vmatprep.subr.mxu0 0.0
        %605 = vmatpush1.msra.mxu0 0.0
        %606 = vmatprep.subr.mxu0 0.0
        %607 = vmatpush1.msra.mxu0 0.0
        %608 = vmatprep.subr.mxu0 0.0
        %609 = vmatpush1.msra.mxu0 0.0
        %610 = vmatprep.subr.mxu0 0.0
        %611 = vmatpush1.msra.mxu0 0.0
        %612 = vmatprep.subr.mxu0 0.0
        %613 = vmatpush1.msra.mxu0 0.0
        %614 = vmatprep.subr.mxu0 0.0
        %615 = vmatpush1.msra.mxu0 0.0
        %616 = vmatprep.subr.mxu0 0.0
        %617 = vmatpush1.msra.mxu0 0.0
        %618 = vmatprep.subr.mxu0 0.0
        %619 = vmatpush1.msra.mxu0 %v587
        %620 = vmatprep.subr.mxu0 0.0
        %621 = vmatpush1.msra.mxu0 %v582
        %622 = vmatprep.subr.mxu0 0.0
        %623 = vmatpush2.msra.mxu0 0.0
        %624 = vmatprep.subr.mxu0 0.0
        %625 = vmatpush2.msra.mxu0 0.0
        %626 = vmatprep.subr.mxu0 0.0
        %627 = vmatpush2.msra.mxu0 0.0
        %628 = vmatprep.subr.mxu0 0.0
        %629 = vmatpush2.msra.mxu0 0.0
        %630 = vmatprep.subr.mxu0 0.0
        %631 = vmatpush2.msra.mxu0 0.0
        %632 = vmatprep.subr.mxu0 0.0
        %633 = vmatpush2.msra.mxu0 0.0
        %634 = vmatprep.subr.mxu0 0.0
        %635 = vmatpush2.msra.mxu0 0.0
        %636 = vmatprep.subr.mxu0 0.0
        %637 = vmatpush2.msra.mxu0 0.0
        %638 = vmatprep.subr.mxu0 0.0
        %639 = vmatpush2.msra.mxu0 0.0
        %640 = vmatprep.subr.mxu0 0.0
        %641 = vmatpush2.msra.mxu0 0.0
        %642 = vmatprep.subr.mxu0 0.0
        %643 = vmatpush2.msra.mxu0 0.0
        %644 = vmatprep.subr.mxu0 0.0
        %645 = vmatpush2.msra.mxu0 0.0
        %646 = vmatprep.subr.mxu0 0.0
        %647 = vmatpush2.msra.mxu0 0.0
        %648 = vmatprep.subr.mxu0 0.0
        %649 = vmatpush2.msra.mxu0 0.0
        %650 = vmatprep.subr.mxu0 0.0
        %651 = vmatpush2.msra.mxu0 0.0
        %652 = vmatprep.subr.mxu0 0.0
        %653 = vmatpush2.msra.mxu0 0.0
        %654 = vmatprep.mubr.f32.mxu0 0.0
        %655 = vmatmul.mubr.f32.gmra.mxu0 %v304
        %v656 = vpop.f32.mrf.mxu0
        %v657 = vadd.f32 0.0, %v656
        %v658 = vpop.f32.mrf.mxu0
        %659 = vmatprep.mubr.f32.mxu0 0.0
        %660 = vmatmul.mubr.f32.gmra.mxu0 %v307
        %v661 = vpop.f32.mrf.mxu0
        %v662 = vadd.f32 0.0, %v661
        %v663 = vpop.f32.mrf.mxu0
        %664 = vdwg.mxu0
        %v665 = vmul.f32 %v657, %v657
        %v666 = vmul.f32 %v662, %v662
        %669 = vrot.lane.b32.xlu0 %v665, 16
        %v670 = vpop.permute.xlu0 %669
        %671 = vrot.lane.b32.xlu0 %v666, 16
        %v672 = vpop.permute.xlu0 %671
        %v675 = vsel %vm302, %v657, %v670
        %v676 = vsel %vm302, %v662, %v672
        %677 = vmatprep.subr.mxu0 0.0
        %678 = vmatpush1.msra.mxu0 0.0
        %679 = vmatprep.subr.mxu0 0.0
        %680 = vmatpush1.msra.mxu0 0.0
        %681 = vmatprep.subr.mxu0 0.0
        %682 = vmatpush1.msra.mxu0 0.0
        %683 = vmatprep.subr.mxu0 0.0
        %684 = vmatpush1.msra.mxu0 0.0
        %685 = vmatprep.subr.mxu0 0.0
        %686 = vmatpush1.msra.mxu0 0.0
        %687 = vmatprep.subr.mxu0 0.0
        %688 = vmatpush1.msra.mxu0 0.0
        %689 = vmatprep.subr.mxu0 0.0
        %690 = vmatpush1.msra.mxu0 0.0
        %691 = vmatprep.subr.mxu0 0.0
        %692 = vmatpush1.msra.mxu0 0.0
        %693 = vmatprep.subr.mxu0 0.0
        %694 = vmatpush1.msra.mxu0 0.0
        %695 = vmatprep.subr.mxu0 0.0
        %696 = vmatpush1.msra.mxu0 0.0
        %697 = vmatprep.subr.mxu0 0.0
        %698 = vmatpush1.msra.mxu0 0.0
        %699 = vmatprep.subr.mxu0 0.0
        %700 = vmatpush1.msra.mxu0 0.0
        %701 = vmatprep.subr.mxu0 0.0
        %702 = vmatpush1.msra.mxu0 0.0
        %703 = vmatprep.subr.mxu0 0.0
        %704 = vmatpush1.msra.mxu0 0.0
        %705 = vmatprep.subr.mxu0 0.0
        %706 = vmatpush1.msra.mxu0 %v676
        %707 = vmatprep.subr.mxu0 0.0
        %708 = vmatpush1.msra.mxu0 %v675
        %709 = vmatprep.subr.mxu0 0.0
        %710 = vmatpush2.msra.mxu0 0.0
        %711 = vmatprep.subr.mxu0 0.0
        %712 = vmatpush2.msra.mxu0 0.0
        %713 = vmatprep.subr.mxu0 0.0
        %714 = vmatpush2.msra.mxu0 0.0
        %715 = vmatprep.subr.mxu0 0.0
        %716 = vmatpush2.msra.mxu0 0.0
        %717 = vmatprep.subr.mxu0 0.0
        %718 = vmatpush2.msra.mxu0 0.0
        %719 = vmatprep.subr.mxu0 0.0
        %720 = vmatpush2.msra.mxu0 0.0
        %721 = vmatprep.subr.mxu0 0.0
        %722 = vmatpush2.msra.mxu0 0.0
        %723 = vmatprep.subr.mxu0 0.0
        %724 = vmatpush2.msra.mxu0 0.0
        %725 = vmatprep.subr.mxu0 0.0
        %726 = vmatpush2.msra.mxu0 0.0
        %727 = vmatprep.subr.mxu0 0.0
        %728 = vmatpush2.msra.mxu0 0.0
        %729 = vmatprep.subr.mxu0 0.0
        %730 = vmatpush2.msra.mxu0 0.0
        %731 = vmatprep.subr.mxu0 0.0
        %732 = vmatpush2.msra.mxu0 0.0
        %733 = vmatprep.subr.mxu0 0.0
        %734 = vmatpush2.msra.mxu0 0.0
        %735 = vmatprep.subr.mxu0 0.0
        %736 = vmatpush2.msra.mxu0 0.0
        %737 = vmatprep.subr.mxu0 0.0
        %738 = vmatpush2.msra.mxu0 0.0
        %739 = vmatprep.subr.mxu0 0.0
        %740 = vmatpush2.msra.mxu0 0.0
        %741 = vmatprep.mubr.f32.mxu0 0.0
        %742 = vmatmul.mubr.f32.gmra.mxu0 %v397
        %v743 = vpop.f32.mrf.mxu0
        %v744 = vadd.f32 0.0, %v743
        %v745 = vpop.f32.mrf.mxu0
        %746 = vdwg.mxu0
        %v747 = vmul.f32 %v744, 0.0625
        %v748 = vmul.f32 %v747, %v747
        %750 = vrot.lane.b32.xlu0 %v748, 16
        %v751 = vpop.permute.xlu0 %750
        %v753 = vsub.f32 %v747, %v751
        %v754 = vmax.f32 %v753, 0.0
        %v755 = vlaneseq
        %v756 = vshrl.u32 %v755, 7
        %v757 = vsub.s32 0, %v756
        %v758 = vrot.slane %v747, %v757
        %v759 = vsub.f32 %v657, %v758
        %v760 = vsub.f32 %v662, %v758
        %v761 = vadd.f32 %v754, 1e-05
        %v762 = vrsqrt.pop %v761
        %v763 = vlaneseq
        %v764 = vshrl.u32 %v763, 7
        %v765 = vsub.s32 0, %v764
        %v766 = vrot.slane %v762, %v765
        %768 = vrot.lane.b32.xlu0 %v766, 112
        %v769 = vpop.permute.xlu0 %768
        %v771 = vmul.f32 %v759, %v769
        %v772 = vmul.f32 %v760, %v769
        %v773 = vlaneseq
        %v774 = vshrl.u32 %v773, 7
        %v775 = vsub.s32 0, %v774
        %v776 = vrot.slane %v213, %v775
        %v777 = vmul.f32 %v771, %v776
        %v778 = vmul.f32 %v772, %v776
        %v779 = vlaneseq
        %v780 = vshrl.u32 %v779, 7
        %v781 = vsub.s32 0, %v780
        %v782 = vrot.slane %v214, %v781
        %v783 = vadd.f32 %v777, %v782
        %v784 = vadd.f32 %v778, %v782
        %v785 = vtanh.pop %v783
        %v786 = vtanh.pop %v784
        %787 = vmatprep.subr.mxu0 0.0
        %788 = vmatpush1.msra.mxu0 0.0
        %789 = vmatprep.subr.mxu0 0.0
        %790 = vmatpush1.msra.mxu0 0.0
        %791 = vmatprep.subr.mxu0 0.0
        %792 = vmatpush1.msra.mxu0 0.0
        %793 = vmatprep.subr.mxu0 0.0
        %794 = vmatpush1.msra.mxu0 0.0
        %795 = vmatprep.subr.mxu0 0.0
        %796 = vmatpush1.msra.mxu0 0.0
        %797 = vmatprep.subr.mxu0 0.0
        %798 = vmatpush1.msra.mxu0 0.0
        %799 = vmatprep.subr.mxu0 0.0
        %800 = vmatpush1.msra.mxu0 0.0
        %801 = vmatprep.subr.mxu0 0.0
        %802 = vmatpush1.msra.mxu0 0.0
        %803 = vmatprep.subr.mxu0 0.0
        %804 = vmatpush1.msra.mxu0 0.0
        %805 = vmatprep.subr.mxu0 0.0
        %806 = vmatpush1.msra.mxu0 0.0
        %807 = vmatprep.subr.mxu0 0.0
        %808 = vmatpush1.msra.mxu0 0.0
        %809 = vmatprep.subr.mxu0 0.0
        %810 = vmatpush1.msra.mxu0 0.0
        %811 = vmatprep.subr.mxu0 0.0
        %812 = vmatpush1.msra.mxu0 0.0
        %813 = vmatprep.subr.mxu0 0.0
        %814 = vmatpush1.msra.mxu0 0.0
        %815 = vmatprep.subr.mxu0 0.0
        %816 = vmatpush1.msra.mxu0 %v786
        %817 = vmatprep.subr.mxu0 0.0
        %818 = vmatpush1.msra.mxu0 %v785
        %819 = vmatprep.subr.mxu0 0.0
        %820 = vmatpush2.msra.mxu0 0.0
        %821 = vmatprep.subr.mxu0 0.0
        %822 = vmatpush2.msra.mxu0 0.0
        %823 = vmatprep.subr.mxu0 0.0
        %824 = vmatpush2.msra.mxu0 0.0
        %825 = vmatprep.subr.mxu0 0.0
        %826 = vmatpush2.msra.mxu0 0.0
        %827 = vmatprep.subr.mxu0 0.0
        %828 = vmatpush2.msra.mxu0 0.0
        %829 = vmatprep.subr.mxu0 0.0
        %830 = vmatpush2.msra.mxu0 0.0
        %831 = vmatprep.subr.mxu0 0.0
        %832 = vmatpush2.msra.mxu0 0.0
        %833 = vmatprep.subr.mxu0 0.0
        %834 = vmatpush2.msra.mxu0 0.0
        %835 = vmatprep.subr.mxu0 0.0
        %836 = vmatpush2.msra.mxu0 0.0
        %837 = vmatprep.subr.mxu0 0.0
        %838 = vmatpush2.msra.mxu0 0.0
        %839 = vmatprep.subr.mxu0 0.0
        %840 = vmatpush2.msra.mxu0 0.0
        %841 = vmatprep.subr.mxu0 0.0
        %842 = vmatpush2.msra.mxu0 0.0
        %843 = vmatprep.subr.mxu0 0.0
        %844 = vmatpush2.msra.mxu0 0.0
        %845 = vmatprep.subr.mxu0 0.0
        %846 = vmatpush2.msra.mxu0 0.0
        %847 = vmatprep.subr.mxu0 0.0
        %848 = vmatpush2.msra.mxu0 0.0
        %849 = vmatprep.subr.mxu0 0.0
        %850 = vmatpush2.msra.mxu0 0.0
        %851 = vmatprep.mubr.f32.mxu0 0.0
        %852 = vmatmul.mubr.f32.gmra.mxu0 %v397
        %v853 = vpop.f32.mrf.mxu0
        %v854 = vadd.f32 0.0, %v853
        %v855 = vpop.f32.mrf.mxu0
        %856 = vdwg.mxu0
        %859 = vrot.lane.b32.xlu0 %v208, 112
        %v860 = vpop.permute.xlu0 %859
        %861 = vrot.lane.b32.xlu0 %v209, 112
        %v862 = vpop.permute.xlu0 %861
        %v866 = vsel %vm302, %v854, 0
        %868 = vmatprep.subr.mxu0 0.0
        %869 = vmatpush1.msra.mxu0 0.0
        %870 = vmatprep.subr.mxu0 0.0
        %871 = vmatpush1.msra.mxu0 0.0
        %872 = vmatprep.subr.mxu0 0.0
        %873 = vmatpush1.msra.mxu0 0.0
        %874 = vmatprep.subr.mxu0 0.0
        %875 = vmatpush1.msra.mxu0 0.0
        %876 = vmatprep.subr.mxu0 0.0
        %877 = vmatpush1.msra.mxu0 0.0
        %878 = vmatprep.subr.mxu0 0.0
        %879 = vmatpush1.msra.mxu0 0.0
        %880 = vmatprep.subr.mxu0 0.0
        %881 = vmatpush1.msra.mxu0 0.0
        %882 = vmatprep.subr.mxu0 0.0
        %883 = vmatpush1.msra.mxu0 0.0
        %884 = vmatprep.subr.mxu0 0.0
        %885 = vmatpush1.msra.mxu0 0.0
        %886 = vmatprep.subr.mxu0 0.0
        %887 = vmatpush1.msra.mxu0 0.0
        %888 = vmatprep.subr.mxu0 0.0
        %889 = vmatpush1.msra.mxu0 0.0
        %890 = vmatprep.subr.mxu0 0.0
        %891 = vmatpush1.msra.mxu0 0.0
        %892 = vmatprep.subr.mxu0 0.0
        %893 = vmatpush1.msra.mxu0 0.0
        %894 = vmatprep.subr.mxu0 0.0
        %895 = vmatpush1.msra.mxu0 0.0
        %896 = vmatprep.subr.mxu0 0.0
        %897 = vmatpush1.msra.mxu0 %v862
        %898 = vmatprep.subr.mxu0 0.0
        %899 = vmatpush1.msra.mxu0 %v860
        %900 = vmatprep.subr.mxu0 0.0
        %901 = vmatpush2.msra.mxu0 0.0
        %902 = vmatprep.subr.mxu0 0.0
        %903 = vmatpush2.msra.mxu0 0.0
        %904 = vmatprep.subr.mxu0 0.0
        %905 = vmatpush2.msra.mxu0 0.0
        %906 = vmatprep.subr.mxu0 0.0
        %907 = vmatpush2.msra.mxu0 0.0
        %908 = vmatprep.subr.mxu0 0.0
        %909 = vmatpush2.msra.mxu0 0.0
        %910 = vmatprep.subr.mxu0 0.0
        %911 = vmatpush2.msra.mxu0 0.0
        %912 = vmatprep.subr.mxu0 0.0
        %913 = vmatpush2.msra.mxu0 0.0
        %914 = vmatprep.subr.mxu0 0.0
        %915 = vmatpush2.msra.mxu0 0.0
        %916 = vmatprep.subr.mxu0 0.0
        %917 = vmatpush2.msra.mxu0 0.0
        %918 = vmatprep.subr.mxu0 0.0
        %919 = vmatpush2.msra.mxu0 0.0
        %920 = vmatprep.subr.mxu0 0.0
        %921 = vmatpush2.msra.mxu0 0.0
        %922 = vmatprep.subr.mxu0 0.0
        %923 = vmatpush2.msra.mxu0 0.0
        %924 = vmatprep.subr.mxu0 0.0
        %925 = vmatpush2.msra.mxu0 0.0
        %926 = vmatprep.subr.mxu0 0.0
        %927 = vmatpush2.msra.mxu0 0.0
        %928 = vmatprep.subr.mxu0 0.0
        %929 = vmatpush2.msra.mxu0 0.0
        %930 = vmatprep.subr.mxu0 0.0
        %931 = vmatpush2.msra.mxu0 0.0
        %932 = vmatprep.mubr.f32.mxu0 0.0
        %933 = vmatmul.mubr.f32.gmra.mxu0 %v866
        %v934 = vpop.f32.mrf.mxu0
        %v935 = vadd.f32 %v215, %v934
        %v936 = vpop.f32.mrf.mxu0
        %937 = vdwg.mxu0
        %vm938 = vcmask 39936
        %v939 = vsel %vm938, %v935, 0.0
        %940 = vst [vmem:[%s192] sm:$0x1] %v939
        %s941 = sand.u32 %s99, 1
        %s942 = scalar_lea.sflag [#allocation4], %s941
        %s943 = sand.u32 %s99, 1
        %s944 = scalar_lea.vmem [#allocation5], %s943
        // Predicated region
        $region37: #{tpu_custom_call.1} parent=31 // pred_check
          %p945 = pneg %p109
        $region38: #{tpu_custom_call.1} parent=31 // pred_check_branch
          %947 = sbr.rel (%p945) target = $region40
        $region39: #{tpu_custom_call.1} parent=31 // pred_region
          %s949 = ssub.s32 16, 16
          %950 = vsyncadd %s942, %s949
          %s951 = smul.addr %s18, 16
          %s952 = scalar_lea.hbm %s3, %s951
          %s954 = sshll.u32 %s944, 4
          %s955 = int_to_ptr.vmem [resolvable:$true] %s954
          %957 = dma.vmem_to_hbm [thread:$0]  %s955, 16, %s952, %s942
        $region40: #{tpu_custom_call.1} parent=31 // pred_fallthru
          _
      $region32: #{tpu_custom_call.1} parent=5 // pred_fallthru
        _
      %p958 = scmp.le.s32.totalorder 2, %s13
      // Predicated region
      $region41: #{tpu_custom_call.1} parent=5 // pred_check
        %p959 = pneg %p958
      $region42: #{tpu_custom_call.1} parent=5 // pred_check_branch
        %961 = sbr.rel (%p959) target = $region44
      $region43: #{tpu_custom_call.1} parent=5 // pred_region
        %s962 = ssub.s32 %s13, 2
        // Predicated region
        $region45: #{tpu_custom_call.1} parent=43 // pred_check
          %p963 = pneg %p115
        $region46: #{tpu_custom_call.1} parent=43 // pred_check_branch
          %965 = sbr.rel (%p963) target = $region48
        $region47: #{tpu_custom_call.1} parent=43 // pred_region
          %s966 = sand.u32 %s100, 1
          %s967 = scalar_lea.sflag [#allocation4], %s966
          %s968 = sand.u32 %s100, 1
          %s969 = scalar_lea.vmem [#allocation5], %s968
          %970 = dma.done %s967, 16
        $region48: #{tpu_custom_call.1} parent=43 // pred_fallthru
          _
      $region44: #{tpu_custom_call.1} parent=5 // pred_fallthru
        _
    $region6: #{tpu_custom_call.1} parent=1 // loop_footer
      %s17 = sadd.s32 1, %s13
    $region7: #{tpu_custom_call.1} parent=1 // loop_footer_branch
      %12 = sbr.rel target = $region3
    $region8: #{tpu_custom_call.1} parent=1 // loop_exit
      _
    %971 = vsyncpa [#allocation3], 1
    %s972 = scalar_lea.sflag [#allocation3], 1
    %973 = vsyncpa %s972, 1
    %974 = vsyncpa [#allocation4], 1
    %s975 = scalar_lea.sflag [#allocation4], 1
    %976 = vsyncpa %s975, 1

</llo_original>
